<compile_context>
chip_gen: v7x
topology: tpu7x:2x2x1
jax: 0.10.0
libtpu: 0.0.40
codegen_flags: <defaults>
</compile_context>

<pallas_src>
import jax
import jax.numpy as jnp
from jax.experimental import pallas as pl
from jax.experimental.pallas import tpu as pltpu

PAD_BYTE = 0          # byte value used for padding
VOCAB_SIZE = 50257    # GPT2 vocab size (token ids stay in this range, < 2**16)

LANES = 128           # lane-dense last dim (multiple of 128 -> unmasked stores)
TILE_ROWS = 2048      # sublanes per grid step (v5e-safe; raise to 4096-8192 on v7x)
ROW_ALIGN = 8         # pad flat length to a multiple of ROW_ALIGN * LANES


def _tokenizer_kernel(bytes_ref, table_ref, ids_ref, mask_ref):
    """bytes_ref: (rows, 128) int8/uint8   raw bytes (bit pattern)
       table_ref: (1, 128)    int32        packed byte->token table: lo | (hi << 16)
       ids_ref:   (rows, 128) int32        token ids
       mask_ref:  (rows, 128) int8         attention mask (1 = real byte, 0 = pad)
    """
    raw = bytes_ref[...]
    b = raw.astype(jnp.int32) & 0xFF                         # bytes in [0, 256)
    rows, lanes = b.shape                                     # lanes == 128

    # Single packed-table gather: lane index is b & 0x7F (always in [0,128),
    # so OOB-clipped garbage rows in the last grid block stay in bounds too),
    # then select the lo/hi 16-bit half by whether the byte is >= 128.
    packed = jnp.broadcast_to(table_ref[...], (rows, lanes))  # (rows, 128) int32
    low7 = b & 0x7F
    v = jnp.take_along_axis(packed, low7, axis=1, mode="promise_in_bounds")
    ids_lo = v & 0xFFFF
    ids_hi = (v >> 16) & 0xFFFF
    ids_ref[...] = jnp.where(b >= 128, ids_hi, ids_lo)

    # Mask computed on the packed 8-bit vregs directly (no widening needed).
    mask_ref[...] = (raw != PAD_BYTE).astype(jnp.int8)


def tokenize(input_bytes, byte_to_token_table):
    """input_bytes: (B, L) int8/uint8 raw bytes; byte_to_token_table: (256,) int."""
    assert input_bytes.dtype in (jnp.int8, jnp.uint8), (
        "pass raw bytes as int8/uint8 straight from the host-side encoder")
    B, L = input_bytes.shape
    n = B * L

    # Minimal padding: whole number of (8, 128) sublane tiles only.  If B*L is
    # already a multiple of 1024 there is no pad and no tail slice (the final
    # reshape is free); otherwise the pad/slice touches <= 1023 extra elements.
    align = ROW_ALIGN * LANES
    n_pad = pl.cdiv(n, align) * align
    rows = n_pad // LANES

    flat = input_bytes.reshape(-1)
    if n_pad != n:
        flat = jnp.pad(flat, (0, n_pad - n), constant_values=PAD_BYTE)
    b2d = flat.reshape(rows, LANES)

    # Pack the two 128-entry table halves into one int32 word per lane.
    tab = byte_to_token_table.astype(jnp.int32)
    lo = tab[:LANES] & 0xFFFF
    hi = tab[LANES:] & 0xFFFF
    packed_table = (lo | (hi << 16)).reshape(1, LANES)        # bit-exact pack

    block_rows = TILE_ROWS if rows >= TILE_ROWS else rows     # full-array block if small
    grid = (pl.cdiv(rows, block_rows),)                       # last block clipped if ragged

    ids2d, mask2d = pl.pallas_call(
        _tokenizer_kernel,
        out_shape=(
            jax.ShapeDtypeStruct((rows, LANES), jnp.int32),   # input_ids
            jax.ShapeDtypeStruct((rows, LANES), jnp.int8),    # attention_mask
        ),
        grid=grid,
        in_specs=[
            pl.BlockSpec((block_rows, LANES), lambda i: (i, 0)),
            pl.BlockSpec((1, LANES), lambda i: (0, 0)),       # table pinned in VMEM
        ],
        out_specs=(
            pl.BlockSpec((block_rows, LANES), lambda i: (i, 0)),
            pl.BlockSpec((block_rows, LANES), lambda i: (i, 0)),
        ),
        compiler_params=pltpu.CompilerParams(
            dimension_semantics=("parallel",),                # megacore-shardable on v7x
            vmem_limit_bytes=32 << 20,
        ),
    )(b2d, packed_table)

    if n_pad != n:
        ids = ids2d.reshape(-1)[:n].reshape(B, L)
        mask = mask2d.reshape(-1)[:n].reshape(B, L)
    else:
        ids = ids2d.reshape(B, L)
        mask = mask2d.reshape(B, L)
    return {"input_ids": ids, "attention_mask": mask}


if __name__ == "__main__":
    B, L = 2, 16

    # Deterministic synthetic byte -> GPT2-token-id vocabulary table
    # (stands in for the GPT2 byte-level vocab; no checkpoint/vocab files).
    byte_vals = jnp.arange(256, dtype=jnp.int32)
    byte_to_token_table = (byte_vals * 7 + 3) % VOCAB_SIZE

    # Deterministic example "text": printable ASCII bytes with trailing padding,
    # delivered as int8 raw bytes (host-encoder format).
    key = jax.random.PRNGKey(0)
    raw = jax.random.randint(key, (B, L), minval=32, maxval=127, dtype=jnp.int32)
    pad_mask = jnp.arange(L)[None, :] < jnp.array([[L - 3], [L - 5]])  # ragged lengths
    input_bytes = jnp.where(pad_mask, raw, PAD_BYTE).astype(jnp.int8)

    out = tokenize(input_bytes, byte_to_token_table)
    jax.block_until_ready(out)

    # Reference check in plain JAX.
    idx = input_bytes.astype(jnp.int32) & 0xFF
    ref_ids = byte_to_token_table[idx]
    ref_mask = (input_bytes != PAD_BYTE).astype(jnp.int8)
    assert jnp.array_equal(out["input_ids"], ref_ids)
    assert jnp.array_equal(out["attention_mask"], ref_mask)

    print("KERNEL_OK")
</pallas_src>

<mosaic_0001>
module attributes {stable_mosaic.version = 11 : i64} {
  func.func @_tokenizer_kernel(%arg0: i32, %arg1: memref<8x128xi8, #tpu.memory_space<vmem>>, %arg2: memref<1x128xi32, #tpu.memory_space<vmem>>, %arg3: memref<8x128xi32, #tpu.memory_space<vmem>>, %arg4: memref<8x128xi8, #tpu.memory_space<vmem>>) attributes {dimension_semantics = [#tpu.dimension_semantics<parallel>], iteration_bounds = array<i64: 1>, scalar_prefetch = 0 : i64, scratch_operands = 0 : i64, tpu.core_type = #tpu.core_type<tc>, window_params = [{transform_indices = @transform_0, window_bounds = array<i64: 8, 128>}, {pipeline_mode = #tpu.pipeline_mode<synchronous>, transform_indices = @transform_1, window_bounds = array<i64: 1, 128>}, {transform_indices = @transform_2, window_bounds = array<i64: 8, 128>}, {transform_indices = @transform_3, window_bounds = array<i64: 8, 128>}]} {
    %c0 = arith.constant 0 : index
    %c0_0 = arith.constant 0 : index
    %0 = vector.load %arg1[%c0, %c0_0] : memref<8x128xi8, #tpu.memory_space<vmem>>, vector<8x128xi8>
    %1 = arith.extsi %0 : vector<8x128xi8> to vector<8x128xi32>
    %c255_i32 = arith.constant 255 : i32
    %2 = vector.broadcast %c255_i32 : i32 to vector<8x128xi32>
    %3 = arith.andi %1, %2 : vector<8x128xi32>
    %c0_1 = arith.constant 0 : index
    %c0_2 = arith.constant 0 : index
    %4 = vector.load %arg2[%c0_1, %c0_2] : memref<1x128xi32, #tpu.memory_space<vmem>>, vector<1x128xi32>
    %5 = vector.shape_cast %4 : vector<1x128xi32> to vector<1x128xi32>
    %6 = vector.broadcast %5 : vector<1x128xi32> to vector<8x128xi32>
    %c127_i32 = arith.constant 127 : i32
    %7 = vector.broadcast %c127_i32 : i32 to vector<8x128xi32>
    %8 = arith.andi %3, %7 : vector<8x128xi32>
    %9 = vector.shape_cast %8 : vector<8x128xi32> to vector<8x128x1xi32>
    %10 = vector.shape_cast %9 : vector<8x128x1xi32> to vector<8x128xi32>
    %11 = tpu.dynamic_gather %6[%10] in [1] : vector<8x128xi32>, vector<8x128xi32> -> vector<8x128xi32>
    %c65535_i32 = arith.constant 65535 : i32
    %12 = vector.broadcast %c65535_i32 : i32 to vector<8x128xi32>
    %13 = arith.andi %11, %12 : vector<8x128xi32>
    %c16_i32 = arith.constant 16 : i32
    %14 = vector.broadcast %c16_i32 : i32 to vector<8x128xi32>
    %15 = arith.shrsi %11, %14 : vector<8x128xi32>
    %c65535_i32_3 = arith.constant 65535 : i32
    %16 = vector.broadcast %c65535_i32_3 : i32 to vector<8x128xi32>
    %17 = arith.andi %15, %16 : vector<8x128xi32>
    %c128_i32 = arith.constant 128 : i32
    %18 = vector.broadcast %c128_i32 : i32 to vector<8x128xi32>
    %19 = arith.cmpi sge, %3, %18 : vector<8x128xi32>
    %20 = arith.select %19, %17, %13 : vector<8x128xi1>, vector<8x128xi32>
    %c0_4 = arith.constant 0 : index
    %c0_5 = arith.constant 0 : index
    %21 = vector.load %arg3[%c0_4, %c0_5] : memref<8x128xi32, #tpu.memory_space<vmem>>, vector<8x128xi32>
    tpu.vector_store %arg3[%c0_4, %c0_5], %20 {strides = array<i32>} : memref<8x128xi32, #tpu.memory_space<vmem>>, vector<8x128xi32>,
    %c0_i8 = arith.constant 0 : i8
    %22 = vector.broadcast %c0_i8 : i8 to vector<8x128xi8>
    %23 = arith.cmpi ne, %0, %22 : vector<8x128xi8>
    %24 = arith.extui %23 : vector<8x128xi1> to vector<8x128xi8>
    %c0_6 = arith.constant 0 : index
    %c0_7 = arith.constant 0 : index
    %25 = vector.load %arg4[%c0_6, %c0_7] : memref<8x128xi8, #tpu.memory_space<vmem>>, vector<8x128xi8>
    tpu.vector_store %arg4[%c0_6, %c0_7], %24 {strides = array<i32>} : memref<8x128xi8, #tpu.memory_space<vmem>>, vector<8x128xi8>,
    return
  }
  func.func @transform_0(%arg0: i32) -> (i32, i32) {
    %c0_i32 = arith.constant 0 : i32
    %c0_i32_0 = arith.constant 0 : i32
    return %arg0, %c0_i32 : i32, i32
  }
  func.func @transform_1(%arg0: i32) -> (i32, i32) {
    %c0_i32 = arith.constant 0 : i32
    %c0_i32_0 = arith.constant 0 : i32
    %c0_i32_1 = arith.constant 0 : i32
    return %c0_i32, %c0_i32_0 : i32, i32
  }
  func.func @transform_2(%arg0: i32) -> (i32, i32) {
    %c0_i32 = arith.constant 0 : i32
    %c0_i32_0 = arith.constant 0 : i32
    return %arg0, %c0_i32 : i32, i32
  }
  func.func @transform_3(%arg0: i32) -> (i32, i32) {
    %c0_i32 = arith.constant 0 : i32
    %c0_i32_0 = arith.constant 0 : i32
    return %arg0, %c0_i32 : i32, i32
  }
}

</mosaic_0001>

<llo_original>
// kernel: tpu_custom_call.1
$region0: #{tpu_custom_call.1}
  #allocation0 [shape = 'u32[]', space=smem, size = 0x4, offset = 0x4, fixed_abs, tag = 'smem constant byte address 0x4 - core index']
  #allocation1 [shape = 'u32[144,128]{1,0:T(1,128)}', space=vmem, size = 0x12000, scoped, tag = 'internal scratch']
  %s0 = inlined_call_operand.hbm [shape: s8[8,128], index: 0, kind: input, shape index: {}]
  %s1 = inlined_call_operand.vmem [shape: s32[1,128], index: 1, kind: input, shape index: {}]
  %s2 = inlined_call_operand.hbm [shape: s32[8,128], index: 2, kind: output, shape index: {0}]
  %s3 = inlined_call_operand.hbm [shape: s8[8,128], index: 3, kind: output, shape index: {1}]
  %4 = xla_tuple %s2, %s3
  %s5 = sld [smem:[#allocation0]]
  $region30: #{tpu_custom_call.1} parent=0
    _
  %s7 = ssub.s32 1, %s5
  %s8 = scalar_select 0, %s7, %s5
  $region1: #{tpu_custom_call.1} parent=0
    #allocation2 [shape = 'u8[1024]{0}', space=vmem, size = 0x400, scoped, tag = 'input window, operand 0, single buffered']
    #allocation3 [shape = 's32[1]{0}', space=sflag, size = 0x4, scoped, tag = 'scoped memory for tpu_custom_call.1']
    #allocation4 [shape = 's32[1]{0}', space=sflag, size = 0x4, scoped, tag = 'scoped memory for tpu_custom_call.1']
    #allocation5 [shape = 'u8[4096]{0}', space=vmem, size = 0x1000, scoped, tag = 'output window, operand 0, single buffered']
    #allocation6 [shape = 'u8[1024]{0}', space=vmem, size = 0x400, scoped, tag = 'output window, operand 1, single buffered']
    #allocation7 [shape = 's32[1]{0}', space=sflag, size = 0x4, scoped, tag = 'scoped memory for tpu_custom_call.1']
    %9 = vsyncpa [#allocation3], 0
    %10 = vsyncpa [#allocation4], 0
    %11 = vsyncpa [#allocation7], 0
    // Predicated region
    $region2: #{tpu_custom_call.1} parent=1 // pred_check
      _
    $region3: #{tpu_custom_call.1} parent=1 // pred_check_branch
      %13 = sbr.rel (0) target = $region5
    $region4: #{tpu_custom_call.1} parent=1 // pred_region
      %s15 = ssub.s32 32, 32
      %16 = vsyncadd [#allocation3], %s15
      %s18 = sshll.u32 [#allocation2], 4
      %s19 = int_to_ptr.vmem [resolvable:$true] %s18
      %21 = dma.hbm_to_vmem [thread:$0]  %s0, 32, %s19, [#allocation3]
    $region5: #{tpu_custom_call.1} parent=1 // pred_fallthru
      _
    // Predicated region
    $region6: #{tpu_custom_call.1} parent=1 // pred_check
      _
    $region7: #{tpu_custom_call.1} parent=1 // pred_check_branch
      %23 = sbr.rel (0) target = $region9
    $region8: #{tpu_custom_call.1} parent=1 // pred_region
      _
    $region9: #{tpu_custom_call.1} parent=1 // pred_fallthru
      _
    // Predicated region
    $region10: #{tpu_custom_call.1} parent=1 // pred_check
      _
    $region11: #{tpu_custom_call.1} parent=1 // pred_check_branch
      %25 = sbr.rel (0) target = $region13
    $region12: #{tpu_custom_call.1} parent=1 // pred_region
      %26 = dma.done [#allocation3], 32
    $region13: #{tpu_custom_call.1} parent=1 // pred_fallthru
      _
    %v29 = vld [vmem:[#allocation2] sm:$0x3]
    %v30 = vunpack.c.0.s8 %v29
    %v31 = vand.u32 %v30, 255
    %v32 = vld [vmem:[%s1] sm:$0x1]
    %v33 = vlaneseq
    %v34 = vshrl.u32 %v33, 7
    %v35 = vsub.s32 0, %v34
    %v36 = vrot.slane %v32, %v35
    %v37 = vand.u32 %v31, 127
    %38 = vset.pattern.permute.xlu0 %v37
    %39 = vperm.xlu0 %38, %v36
    %v40 = vpop.permute.xlu0 %39
    %v41 = vand.u32 %v40, 65535
    %v42 = vshra.s32 %v40, 16
    %v43 = vand.u32 %v42, 65535
    %vm44 = vcmp.ge.s32.totalorder %v31, 128
    %v45 = vsel %vm44, %v43, %v41
    %46 = vst [vmem:[#allocation5] sm:$0xff] %v45
    %vm47 = vnez %v29
    %v48 = vsel %vm47, 16843009, 0
    %49 = vst [vmem:[#allocation6] sm:$0x3] %v48
    // Predicated region
    $region14: #{tpu_custom_call.1} parent=1 // pred_check
      _
    $region15: #{tpu_custom_call.1} parent=1 // pred_check_branch
      %51 = sbr.rel (0) target = $region17
    $region16: #{tpu_custom_call.1} parent=1 // pred_region
      %s53 = ssub.s32 128, 128
      %54 = vsyncadd [#allocation4], %s53
      %s56 = sshll.u32 [#allocation5], 4
      %s57 = int_to_ptr.vmem [resolvable:$true] %s56
      %59 = dma.vmem_to_hbm [thread:$0]  %s57, 128, %s2, [#allocation4]
    $region17: #{tpu_custom_call.1} parent=1 // pred_fallthru
      _
    // Predicated region
    $region18: #{tpu_custom_call.1} parent=1 // pred_check
      _
    $region19: #{tpu_custom_call.1} parent=1 // pred_check_branch
      %61 = sbr.rel (0) target = $region21
    $region20: #{tpu_custom_call.1} parent=1 // pred_region
      %s63 = ssub.s32 32, 32
      %64 = vsyncadd [#allocation7], %s63
      %s66 = sshll.u32 [#allocation6], 4
      %s67 = int_to_ptr.vmem [resolvable:$true] %s66
      %69 = dma.vmem_to_hbm [thread:$0]  %s67, 32, %s3, [#allocation7]
    $region21: #{tpu_custom_call.1} parent=1 // pred_fallthru
      _
    // Predicated region
    $region22: #{tpu_custom_call.1} parent=1 // pred_check
      _
    $region23: #{tpu_custom_call.1} parent=1 // pred_check_branch
      %71 = sbr.rel (0) target = $region25
    $region24: #{tpu_custom_call.1} parent=1 // pred_region
      %72 = dma.done [#allocation4], 128
    $region25: #{tpu_custom_call.1} parent=1 // pred_fallthru
      _
    // Predicated region
    $region26: #{tpu_custom_call.1} parent=1 // pred_check
      _
    $region27: #{tpu_custom_call.1} parent=1 // pred_check_branch
      %74 = sbr.rel (0) target = $region29
    $region28: #{tpu_custom_call.1} parent=1 // pred_region
      %75 = dma.done [#allocation7], 32
    $region29: #{tpu_custom_call.1} parent=1 // pred_fallthru
      _
    %76 = vsyncpa [#allocation3], 1
    %77 = vsyncpa [#allocation4], 1
    %78 = vsyncpa [#allocation7], 1

</llo_original>
